<compile_context>
chip_gen: v5e
topology: v5e:2x2
jax: 0.10.0
libtpu: 0.0.40
codegen_flags: <defaults>
</compile_context>

<pallas_src>
import functools

import jax
import jax.numpy as jnp
import numpy as np
from jax.experimental import pallas as pl
from jax.experimental.pallas import tpu as pltpu

IN_EPS = 1e-3   # InstanceNorm2d eps (module uses eps=0.001)
BN_EPS = 1e-5   # BatchNorm2d default eps


def _diff_unpool_kernel(x_up_ref, x_down_ref, a_ref, c_ref, w_ref, b_ref,
                        out_ref, *, n_valid, tn, mask_tail, bf16_exp):
    # x_up_ref  : [1, C_in, TN]  f32   current (batch, N-tile)
    # x_down_ref: [1, C_dn, P]   bf16  current batch element (resident)
    # a_ref     : [1, C_in, 1]   f32   IN inv_std * BN scale   (per batch/chan)
    # c_ref     : [1, C_in, 1]   f32   BN shift - IN mean * a  (per batch/chan)
    # w_ref     : [P, C_in]      bf16  1x1 conv weight (resident)
    # b_ref     : [P, 1]         f32   1x1 conv bias   (resident)
    # out_ref   : [1, C_dn, TN]  out_dtype
    x = x_up_ref[0]                                            # [C_in, TN]

    # InstanceNorm + folded eval-BatchNorm as a single FMA, then ReLU.
    y = jnp.maximum(x * a_ref[0] + c_ref[0], 0.0)              # [C_in, TN]

    if mask_tail:
        # Ragged last tile: columns beyond N hold unspecified data (no pad was
        # done in the wrapper).  Zero them so no NaN/Inf flows through exp.
        j = pl.program_id(1)
        col = j * tn + jax.lax.broadcasted_iota(jnp.int32, y.shape, 1)
        y = jnp.where(col < n_valid, y, 0.0)

    # 1x1 conv over channels == matmul on the MXU (bf16 in, f32 accumulate).
    embed = jnp.dot(w_ref[...], y.astype(jnp.bfloat16),
                    preferred_element_type=jnp.float32) + b_ref[...]  # [P, TN]

    # Softmax over the output_points (P) axis, column-wise independent.
    m = jnp.max(embed, axis=0, keepdims=True)
    z = embed - m
    if bf16_exp:
        # v6e/v7x large-P path: bf16 EUP exp roughly doubles transcendental
        # throughput; keep the sum / reciprocal / normalize in f32.
        e = jnp.exp(z.astype(jnp.bfloat16)).astype(jnp.float32)
    else:
        e = jnp.exp(z)
    s = e * pl.reciprocal(jnp.sum(e, axis=0, keepdims=True), approx=True)

    # out = x_down @ S : [C_dn, P] @ [P, TN] -> [C_dn, TN]
    out_ref[0] = jnp.dot(x_down_ref[0], s.astype(jnp.bfloat16),
                         preferred_element_type=jnp.float32
                         ).astype(out_ref.dtype)


def diff_unpool(x_up, x_down, bn_gamma, bn_beta, bn_rmean, bn_rvar,
                conv_w, conv_b, *, tn=1024, out_dtype=jnp.float32,
                bf16_exp=False):
    """x_up: [B, C_in, N, 1], x_down: [B, C_dn, P, 1]  ->  [B, C_dn, N, 1]."""
    B, C_in, N, _ = x_up.shape
    _, C_dn, P, _ = x_down.shape

    x2 = x_up[..., 0].astype(jnp.float32)                 # [B, C_in, N] (view)
    xd = x_down[..., 0].astype(jnp.bfloat16)              # [B, C_dn, P] MXU operand

    # --- Hoisted InstanceNorm statistics over the FULL N per (batch, channel).
    #     Two-pass mean / (x - mu)^2: matches InstanceNorm2d exactly and avoids
    #     the E[x^2] - mu^2 cancellation when |mean| >> std.
    mu = jnp.mean(x2, axis=2, keepdims=True)               # [B, C_in, 1]
    var = jnp.mean(jnp.square(x2 - mu), axis=2, keepdims=True)
    inv_std = jax.lax.rsqrt(var + IN_EPS)

    # --- Eval-mode BatchNorm folded to a per-channel affine, fused with IN.
    bn_inv = jax.lax.rsqrt(bn_rvar + BN_EPS)
    bn_scale = (bn_gamma * bn_inv)[None, :, None]
    bn_shift = (bn_beta - bn_rmean * bn_gamma * bn_inv)[None, :, None]
    a = (inv_std * bn_scale).astype(jnp.float32)           # [B, C_in, 1]
    c = (bn_shift - mu * inv_std * bn_scale).astype(jnp.float32)

    w = conv_w.reshape(P, C_in).astype(jnp.bfloat16)        # [P, C_in]
    b = conv_b.reshape(P, 1).astype(jnp.float32)            # [P, 1]

    # --- Lane-dense N tiling (no wrapper pad):
    #     * P >= 512: cap TN at 1024 so ~3x [P, TN] f32 softmax intermediates
    #       plus double-buffered I/O stay well inside v7x's 64 MiB VMEM.
    #     * N <= TN : single full-width tile (block dim == full array dim).
    #     * else    : TN forced to a multiple of 128; last tile may be ragged
    #       and is masked inside the kernel.
    if P >= 512:
        tn = min(tn, 1024)
    if N <= tn:
        tn = N
        mask_tail = False
    else:
        tn = max(128, (tn // 128) * 128)
        mask_tail = (N % tn) != 0
    n_tiles = pl.cdiv(N, tn)

    kernel = functools.partial(_diff_unpool_kernel, n_valid=N, tn=tn,
                               mask_tail=mask_tail, bf16_exp=bf16_exp)

    out = pl.pallas_call(
        kernel,
        out_shape=jax.ShapeDtypeStruct((B, C_dn, N), out_dtype),
        grid_spec=pltpu.PrefetchScalarGridSpec(
            num_scalar_prefetch=0,
            grid=(B, n_tiles),
            in_specs=[
                pl.BlockSpec((1, C_in, tn), lambda bi, j: (bi, 0, j)),
                pl.BlockSpec((1, C_dn, P), lambda bi, j: (bi, 0, 0)),
                pl.BlockSpec((1, C_in, 1), lambda bi, j: (bi, 0, 0)),
                pl.BlockSpec((1, C_in, 1), lambda bi, j: (bi, 0, 0)),
                pl.BlockSpec((P, C_in), lambda bi, j: (0, 0)),
                pl.BlockSpec((P, 1), lambda bi, j: (0, 0)),
            ],
            out_specs=pl.BlockSpec((1, C_dn, tn), lambda bi, j: (bi, 0, j)),
        ),
        compiler_params=pltpu.CompilerParams(
            dimension_semantics=("parallel", "parallel"),  # B and N-tiles
            vmem_limit_bytes=48 * 1024 * 1024,             # < 64 MiB v7x physical
        ),
    )(x2, xd, a, c, w, b)

    return out[:, :, :, None]                              # [B, C_dn, N, 1]


def _reference(x_up, x_down, bn_gamma, bn_beta, bn_rmean, bn_rvar,
               conv_w, conv_b):
    """Plain-JAX f32 reference mirroring the PyTorch forward (eval mode)."""
    x = x_up[..., 0]                                       # [B, C_in, N]
    mu = jnp.mean(x, axis=2, keepdims=True)
    var = jnp.mean((x - mu) ** 2, axis=2, keepdims=True)
    xn = (x - mu) / jnp.sqrt(var + IN_EPS)
    g = bn_gamma[None, :, None]
    bta = bn_beta[None, :, None]
    rm = bn_rmean[None, :, None]
    rv = bn_rvar[None, :, None]
    y = (xn - rm) / jnp.sqrt(rv + BN_EPS) * g + bta
    y = jnp.maximum(y, 0.0)
    w = conv_w.reshape(conv_w.shape[0], conv_w.shape[1])
    embed = jnp.einsum('pc,bcn->bpn', w, y) + conv_b[None, :, None]
    s = jax.nn.softmax(embed, axis=1)                      # [B, P, N]
    out = jnp.einsum('bcp,bpn->bcn', x_down[..., 0], s)
    return out[..., None]


if __name__ == "__main__":
    # Small shapes consistent with the module: x_up [B, C_in, N, 1],
    # x_down [B, C_dn, P, 1] where P == output_points.
    B, C_in, N = 2, 8, 16
    P, C_dn = 8, 16

    key = jax.random.PRNGKey(0)
    k1, k2, k3, k4, k5, k6, k7, k8 = jax.random.split(key, 8)

    x_up = jax.random.normal(k1, (B, C_in, N, 1), dtype=jnp.float32)
    x_down = jax.random.normal(k2, (B, C_dn, P, 1), dtype=jnp.float32)

    # Deterministic "parameters" (synthetic init, eval-mode BatchNorm stats).
    bn_gamma = 1.0 + 0.1 * jax.random.normal(k3, (C_in,), dtype=jnp.float32)
    bn_beta = 0.1 * jax.random.normal(k4, (C_in,), dtype=jnp.float32)
    bn_rmean = 0.1 * jax.random.normal(k7, (C_in,), dtype=jnp.float32)
    bn_rvar = 1.0 + 0.1 * jnp.abs(jax.random.normal(k8, (C_in,),
                                                    dtype=jnp.float32))
    conv_w = jax.random.normal(k5, (P, C_in, 1, 1), dtype=jnp.float32) * 0.2
    conv_b = 0.05 * jax.random.normal(k6, (P,), dtype=jnp.float32)

    out = diff_unpool(x_up, x_down, bn_gamma, bn_beta, bn_rmean, bn_rvar,
                      conv_w, conv_b)
    out = jax.block_until_ready(out)

    ref = _reference(x_up, x_down, bn_gamma, bn_beta, bn_rmean, bn_rvar,
                     conv_w, conv_b)
    # Tolerance accounts for bf16 MXU operands (f32 accumulation) and the
    # approx EUP reciprocal in the softmax normalization.
    np.testing.assert_allclose(np.asarray(out), np.asarray(ref),
                               rtol=5e-2, atol=5e-2)
    assert out.shape == (B, C_dn, N, 1)
    print("KERNEL_OK")
</pallas_src>

<mosaic_0001>
module attributes {stable_mosaic.version = 11 : i64} {
  func.func @_diff_unpool_kernel(%arg0: i32, %arg1: i32, %arg2: memref<1x8x16xf32, #tpu.memory_space<vmem>>, %arg3: memref<1x16x8xbf16, #tpu.memory_space<vmem>>, %arg4: memref<1x8x1xf32, #tpu.memory_space<vmem>>, %arg5: memref<1x8x1xf32, #tpu.memory_space<vmem>>, %arg6: memref<8x8xbf16, #tpu.memory_space<vmem>>, %arg7: memref<8x1xf32, #tpu.memory_space<vmem>>, %arg8: memref<1x16x16xf32, #tpu.memory_space<vmem>>) attributes {dimension_semantics = [#tpu.dimension_semantics<parallel>, #tpu.dimension_semantics<parallel>], iteration_bounds = array<i64: 2, 1>, scalar_prefetch = 0 : i64, scratch_operands = 0 : i64, tpu.core_type = #tpu.core_type<tc>, window_params = [{transform_indices = @transform_0, window_bounds = array<i64: 1, 8, 16>}, {transform_indices = @transform_1, window_bounds = array<i64: 1, 16, 8>}, {transform_indices = @transform_2, window_bounds = array<i64: 1, 8, 1>}, {transform_indices = @transform_3, window_bounds = array<i64: 1, 8, 1>}, {pipeline_mode = #tpu.pipeline_mode<synchronous>, transform_indices = @transform_4, window_bounds = array<i64: 8, 8>}, {pipeline_mode = #tpu.pipeline_mode<synchronous>, transform_indices = @transform_5, window_bounds = array<i64: 8, 1>}, {transform_indices = @transform_6, window_bounds = array<i64: 1, 16, 16>}]} {
    %c0 = arith.constant 0 : index
    %c0_0 = arith.constant 0 : index
    %c0_1 = arith.constant 0 : index
    %0 = vector.load %arg2[%c0, %c0_0, %c0_1] : memref<1x8x16xf32, #tpu.memory_space<vmem>>, vector<1x8x16xf32>
    %1 = vector.shape_cast %0 : vector<1x8x16xf32> to vector<8x16xf32>
    %c0_2 = arith.constant 0 : index
    %c0_3 = arith.constant 0 : index
    %c0_4 = arith.constant 0 : index
    %2 = vector.load %arg4[%c0_2, %c0_3, %c0_4] : memref<1x8x1xf32, #tpu.memory_space<vmem>>, vector<1x8x1xf32>
    %3 = vector.shape_cast %2 : vector<1x8x1xf32> to vector<8x1xf32>
    %4 = vector.broadcast %3 : vector<8x1xf32> to vector<8x16xf32>
    %5 = arith.mulf %1, %4 : vector<8x16xf32>
    %c0_5 = arith.constant 0 : index
    %c0_6 = arith.constant 0 : index
    %c0_7 = arith.constant 0 : index
    %6 = vector.load %arg5[%c0_5, %c0_6, %c0_7] : memref<1x8x1xf32, #tpu.memory_space<vmem>>, vector<1x8x1xf32>
    %7 = vector.shape_cast %6 : vector<1x8x1xf32> to vector<8x1xf32>
    %8 = vector.broadcast %7 : vector<8x1xf32> to vector<8x16xf32>
    %9 = arith.addf %5, %8 : vector<8x16xf32>
    %cst = arith.constant 0.000000e+00 : f32
    %10 = vector.broadcast %cst : f32 to vector<8x16xf32>
    %11 = arith.maximumf %9, %10 : vector<8x16xf32>
    %c0_8 = arith.constant 0 : index
    %c0_9 = arith.constant 0 : index
    %12 = vector.load %arg6[%c0_8, %c0_9] : memref<8x8xbf16, #tpu.memory_space<vmem>>, vector<8x8xbf16>
    %13 = arith.truncf %11 : vector<8x16xf32> to vector<8x16xbf16>
    %cst_10 = arith.constant dense<0.000000e+00> : vector<8x16xf32>
    %14 = tpu.matmul %12, %13, %cst_10 {dimension_numbers = #tpu.dot_dimension_numbers<[1], [0], [0], [1], [0, 0, 1, 1], [], []>} : vector<8x8xbf16>, vector<8x16xbf16>, vector<8x16xf32> -> vector<8x16xf32>
    %c0_11 = arith.constant 0 : index
    %c0_12 = arith.constant 0 : index
    %15 = vector.load %arg7[%c0_11, %c0_12] : memref<8x1xf32, #tpu.memory_space<vmem>>, vector<8x1xf32>
    %16 = vector.broadcast %15 : vector<8x1xf32> to vector<8x16xf32>
    %17 = arith.addf %14, %16 : vector<8x16xf32>
    %cst_13 = arith.constant dense<0xFF800000> : vector<16xf32>
    %18 = vector.multi_reduction <maximumf>, %17, %cst_13 [0] : vector<8x16xf32> to vector<16xf32>
    %19 = vector.shape_cast %18 : vector<16xf32> to vector<1x16xf32>
    %20 = vector.broadcast %19 : vector<1x16xf32> to vector<8x16xf32>
    %21 = arith.subf %17, %20 : vector<8x16xf32>
    %22 = math.exp %21 : vector<8x16xf32>
    %cst_14 = arith.constant dense<0.000000e+00> : vector<16xf32>
    %23 = vector.multi_reduction <add>, %22, %cst_14 [0] : vector<8x16xf32> to vector<16xf32>
    %24 = vector.shape_cast %23 : vector<16xf32> to vector<1x16xf32>
    %25 = tpu.reciprocal %24 {approx = true} : vector<1x16xf32> -> vector<1x16xf32>
    %26 = vector.broadcast %25 : vector<1x16xf32> to vector<8x16xf32>
    %27 = arith.mulf %22, %26 : vector<8x16xf32>
    %c0_15 = arith.constant 0 : index
    %c0_16 = arith.constant 0 : index
    %c0_17 = arith.constant 0 : index
    %28 = vector.load %arg3[%c0_15, %c0_16, %c0_17] : memref<1x16x8xbf16, #tpu.memory_space<vmem>>, vector<1x16x8xbf16>
    %29 = vector.shape_cast %28 : vector<1x16x8xbf16> to vector<16x8xbf16>
    %30 = arith.truncf %27 : vector<8x16xf32> to vector<8x16xbf16>
    %cst_18 = arith.constant dense<0.000000e+00> : vector<16x16xf32>
    %31 = tpu.matmul %29, %30, %cst_18 {dimension_numbers = #tpu.dot_dimension_numbers<[1], [0], [0], [1], [0, 0, 1, 1], [], []>} : vector<16x8xbf16>, vector<8x16xbf16>, vector<16x16xf32> -> vector<16x16xf32>
    %c0_19 = arith.constant 0 : index
    %c0_20 = arith.constant 0 : index
    %c0_21 = arith.constant 0 : index
    %32 = vector.load %arg8[%c0_19, %c0_20, %c0_21] : memref<1x16x16xf32, #tpu.memory_space<vmem>>, vector<1x16x16xf32>
    %33 = vector.shape_cast %32 : vector<1x16x16xf32> to vector<16x16xf32>
    %34 = vector.shape_cast %31 : vector<16x16xf32> to vector<1x16x16xf32>
    tpu.vector_store %arg8[%c0_19, %c0_20, %c0_21], %34 {strides = array<i32>} : memref<1x16x16xf32, #tpu.memory_space<vmem>>, vector<1x16x16xf32>,
    return
  }
  func.func @transform_0(%arg0: i32, %arg1: i32) -> (i32, i32, i32) {
    %c0_i32 = arith.constant 0 : i32
    %c0_i32_0 = arith.constant 0 : i32
    return %arg0, %c0_i32, %arg1 : i32, i32, i32
  }
  func.func @transform_1(%arg0: i32, %arg1: i32) -> (i32, i32, i32) {
    %c0_i32 = arith.constant 0 : i32
    %c0_i32_0 = arith.constant 0 : i32
    %c0_i32_1 = arith.constant 0 : i32
    return %arg0, %c0_i32, %c0_i32_0 : i32, i32, i32
  }
  func.func @transform_2(%arg0: i32, %arg1: i32) -> (i32, i32, i32) {
    %c0_i32 = arith.constant 0 : i32
    %c0_i32_0 = arith.constant 0 : i32
    %c0_i32_1 = arith.constant 0 : i32
    return %arg0, %c0_i32, %c0_i32_0 : i32, i32, i32
  }
  func.func @transform_3(%arg0: i32, %arg1: i32) -> (i32, i32, i32) {
    %c0_i32 = arith.constant 0 : i32
    %c0_i32_0 = arith.constant 0 : i32
    %c0_i32_1 = arith.constant 0 : i32
    return %arg0, %c0_i32, %c0_i32_0 : i32, i32, i32
  }
  func.func @transform_4(%arg0: i32, %arg1: i32) -> (i32, i32) {
    %c0_i32 = arith.constant 0 : i32
    %c0_i32_0 = arith.constant 0 : i32
    %c0_i32_1 = arith.constant 0 : i32
    return %c0_i32, %c0_i32_0 : i32, i32
  }
  func.func @transform_5(%arg0: i32, %arg1: i32) -> (i32, i32) {
    %c0_i32 = arith.constant 0 : i32
    %c0_i32_0 = arith.constant 0 : i32
    %c0_i32_1 = arith.constant 0 : i32
    return %c0_i32, %c0_i32_0 : i32, i32
  }
  func.func @transform_6(%arg0: i32, %arg1: i32) -> (i32, i32, i32) {
    %c0_i32 = arith.constant 0 : i32
    %c0_i32_0 = arith.constant 0 : i32
    return %arg0, %c0_i32, %arg1 : i32, i32, i32
  }
}

</mosaic_0001>

<llo_original>
// kernel: tpu_custom_call.1
$region0: #{tpu_custom_call.1}
  #allocation0 [shape = 'u32[]', space=smem, size = 0x4, offset = 0x4, fixed_abs, tag = 'smem constant byte address 0x4 - core index']
  #allocation1 [shape = 'u32[72,128]{1,0:T(1,128)}', space=vmem, size = 0x9000, scoped, tag = 'internal scratch']
  %s0 = inlined_call_operand.vmem [shape: f32[2,8,16], index: 0, kind: input, shape index: {}]
  %s1 = inlined_call_operand.vmem [shape: bf16[2,16,8], index: 1, kind: input, shape index: {}]
  %s2 = inlined_call_operand.vmem [shape: f32[2,8,1], index: 2, kind: input, shape index: {}]
  %s3 = inlined_call_operand.vmem [shape: f32[2,8,1], index: 3, kind: input, shape index: {}]
  %s4 = inlined_call_operand.vmem [shape: bf16[8,8], index: 4, kind: input, shape index: {}]
  %s5 = inlined_call_operand.vmem [shape: f32[8,1], index: 5, kind: input, shape index: {}]
  %s6 = inlined_call_operand.hbm [shape: f32[2,16,16], index: 6, kind: output, shape index: {}]
  %s7 = sld [smem:[#allocation0]]
  $region57: #{tpu_custom_call.1} parent=0
    _
  %s9 = ssub.s32 1, %s7
  %s10 = scalar_select 0, %s9, %s7
  $region1: #{tpu_custom_call.1} parent=0
    #allocation2 [shape = 'u8[16384]{0}', space=vmem, size = 0x4000, scoped, tag = 'output window, operand 0']
    #allocation3 [shape = 's32[2]{0}', space=sflag, size = 0x8, scoped, tag = 'scoped memory for tpu_custom_call.1']
    %11 = vsyncpa [#allocation3], 0
    %s12 = scalar_lea.sflag [#allocation3], 1
    %13 = vsyncpa %s12, 0
    loop: start=0, step=1, limit=4
    $region2: #{tpu_custom_call.1} parent=1 // loop_pre_header
      _
    $region3: #{tpu_custom_call.1} parent=1 // loop_header
      %s15 = sphi 0, %s19
      %p16 = scmp.ge.s32.totalorder %s15, 4
      %s22 = sphi 0, %s34
      %s23 = sphi 0, %s30
      %s24 = sphi 0, %s22
      %s25 = sphi 0, %s23
      %s26 = sphi 0, %s24
      %s27 = sphi 0, %s25
      %s39 = sphi 0, %s41
      %s42 = sphi 0, %s39
      %s43 = sphi 0, %s42
      %s59 = sphi 0, %s43
      %s65 = sphi 0, %s67
      %s68 = sphi 0, %s65
      %s69 = sphi 0, %s68
      %s85 = sphi 0, %s69
      %s91 = sphi 0, %s93
      %s94 = sphi 0, %s91
      %s95 = sphi 0, %s94
      %s111 = sphi 0, %s95
      %s117 = sphi 0, %s119
      %s120 = sphi 0, %s117
      %s121 = sphi 0, %s120
      %s137 = sphi 0, %s121
      %s141 = sphi 0, %s141
      %s143 = sphi 0, %s141
      %s144 = sphi 0, %s143
      %s158 = sphi 0, %s144
      %s162 = sphi 0, %s162
      %s164 = sphi 0, %s162
      %s165 = sphi 0, %s164
      %s179 = sphi 0, %s165
      %s187 = sphi 0, %s189
      %s190 = sphi 0, %s187
      %s191 = sphi 0, %s190
      %s207 = sphi 0, %s191
    $region4: #{tpu_custom_call.1} parent=1 // loop_header_branch
      %18 = sbr.rel (%p16) target = $region8
    $region5: #{tpu_custom_call.1} parent=1 // loop_body
      %s20 = ssub.s32 %s15, 1
      %s21 = ssub.s32 %s15, 2
      %s28 = sadd.s32 1, %s23
      %p29 = scmp.ge.s32.totalorder %s28, 1
      %s30 = scalar_select %p29, 0, %s28
      %s31 = sadd.s32 1, %s22
      %s32 = scalar_select %p29, %s31, %s22
      %p33 = scmp.ge.s32.totalorder %s32, 2
      %s34 = scalar_select %p33, 0, %s32
      %s35 = ssub.s32 %s22, %s34
      %s36 = ssub.s32 %s23, %s30
      %s37 = sor.u32 %s35, %s36
      %p38 = scmp.eq.s32.totalorder %s37, 0
      %s40 = sadd.s32 %s39, 1
      %s41 = scalar_select %p38, %s39, %s40
      %p44 = pneg %p38
      %p45 = scmp.eq.s32.totalorder %s15, 1
      %p46 = por %p44, %p45
      %p47 = scmp.ne.s32.totalorder %s39, %s42
      %p48 = scmp.eq.s32.totalorder %s15, 0
      %p49 = por %p47, %p48
      %p50 = scmp.ne.s32.totalorder %s39, %s42
      %p51 = scmp.eq.s32.totalorder %s20, 1
      %p52 = por %p50, %p51
      %p53 = scmp.ne.s32.totalorder %s42, %s43
      %p54 = scmp.eq.s32.totalorder %s20, 0
      %p55 = por %p53, %p54
      %p56 = scmp.ne.s32.totalorder %s42, %s43
      %p57 = scmp.eq.s32.totalorder %s21, 1
      %p58 = por %p56, %p57
      %p60 = scmp.ne.s32.totalorder %s43, %s59
      %p61 = scmp.eq.s32.totalorder %s21, 0
      %p62 = por %p60, %p61
      %s63 = ssub.s32 %s22, %s34
      %p64 = scmp.eq.s32.totalorder %s63, 0
      %s66 = sadd.s32 %s65, 1
      %s67 = scalar_select %p64, %s65, %s66
      %p70 = pneg %p64
      %p71 = scmp.eq.s32.totalorder %s15, 1
      %p72 = por %p70, %p71
      %p73 = scmp.ne.s32.totalorder %s65, %s68
      %p74 = scmp.eq.s32.totalorder %s15, 0
      %p75 = por %p73, %p74
      %p76 = scmp.ne.s32.totalorder %s65, %s68
      %p77 = scmp.eq.s32.totalorder %s20, 1
      %p78 = por %p76, %p77
      %p79 = scmp.ne.s32.totalorder %s68, %s69
      %p80 = scmp.eq.s32.totalorder %s20, 0
      %p81 = por %p79, %p80
      %p82 = scmp.ne.s32.totalorder %s68, %s69
      %p83 = scmp.eq.s32.totalorder %s21, 1
      %p84 = por %p82, %p83
      %p86 = scmp.ne.s32.totalorder %s69, %s85
      %p87 = scmp.eq.s32.totalorder %s21, 0
      %p88 = por %p86, %p87
      %s89 = ssub.s32 %s22, %s34
      %p90 = scmp.eq.s32.totalorder %s89, 0
      %s92 = sadd.s32 %s91, 1
      %s93 = scalar_select %p90, %s91, %s92
      %p96 = pneg %p90
      %p97 = scmp.eq.s32.totalorder %s15, 1
      %p98 = por %p96, %p97
      %p99 = scmp.ne.s32.totalorder %s91, %s94
      %p100 = scmp.eq.s32.totalorder %s15, 0
      %p101 = por %p99, %p100
      %p102 = scmp.ne.s32.totalorder %s91, %s94
      %p103 = scmp.eq.s32.totalorder %s20, 1
      %p104 = por %p102, %p103
      %p105 = scmp.ne.s32.totalorder %s94, %s95
      %p106 = scmp.eq.s32.totalorder %s20, 0
      %p107 = por %p105, %p106
      %p108 = scmp.ne.s32.totalorder %s94, %s95
      %p109 = scmp.eq.s32.totalorder %s21, 1
      %p110 = por %p108, %p109
      %p112 = scmp.ne.s32.totalorder %s95, %s111
      %p113 = scmp.eq.s32.totalorder %s21, 0
      %p114 = por %p112, %p113
      %s115 = ssub.s32 %s22, %s34
      %p116 = scmp.eq.s32.totalorder %s115, 0
      %s118 = sadd.s32 %s117, 1
      %s119 = scalar_select %p116, %s117, %s118
      %p122 = pneg %p116
      %p123 = scmp.eq.s32.totalorder %s15, 1
      %p124 = por %p122, %p123
      %p125 = scmp.ne.s32.totalorder %s117, %s120
      %p126 = scmp.eq.s32.totalorder %s15, 0
      %p127 = por %p125, %p126
      %p128 = scmp.ne.s32.totalorder %s117, %s120
      %p129 = scmp.eq.s32.totalorder %s20, 1
      %p130 = por %p128, %p129
      %p131 = scmp.ne.s32.totalorder %s120, %s121
      %p132 = scmp.eq.s32.totalorder %s20, 0
      %p133 = por %p131, %p132
      %p134 = scmp.ne.s32.totalorder %s120, %s121
      %p135 = scmp.eq.s32.totalorder %s21, 1
      %p136 = por %p134, %p135
      %p138 = scmp.ne.s32.totalorder %s121, %s137
      %p139 = scmp.eq.s32.totalorder %s21, 0
      %p140 = por %p138, %p139
      %s142 = sadd.s32 %s141, 1
      %p145 = scmp.eq.s32.totalorder %s15, 1
      %p146 = scmp.ne.s32.totalorder %s141, %s143
      %p147 = scmp.eq.s32.totalorder %s15, 0
      %p148 = por %p146, %p147
      %p149 = scmp.ne.s32.totalorder %s141, %s143
      %p150 = scmp.eq.s32.totalorder %s20, 1
      %p151 = por %p149, %p150
      %p152 = scmp.ne.s32.totalorder %s143, %s144
      %p153 = scmp.eq.s32.totalorder %s20, 0
      %p154 = por %p152, %p153
      %p155 = scmp.ne.s32.totalorder %s143, %s144
      %p156 = scmp.eq.s32.totalorder %s21, 1
      %p157 = por %p155, %p156
      %p159 = scmp.ne.s32.totalorder %s144, %s158
      %p160 = scmp.eq.s32.totalorder %s21, 0
      %p161 = por %p159, %p160
      %s163 = sadd.s32 %s162, 1
      %p166 = scmp.eq.s32.totalorder %s15, 1
      %p167 = scmp.ne.s32.totalorder %s162, %s164
      %p168 = scmp.eq.s32.totalorder %s15, 0
      %p169 = por %p167, %p168
      %p170 = scmp.ne.s32.totalorder %s162, %s164
      %p171 = scmp.eq.s32.totalorder %s20, 1
      %p172 = por %p170, %p171
      %p173 = scmp.ne.s32.totalorder %s164, %s165
      %p174 = scmp.eq.s32.totalorder %s20, 0
      %p175 = por %p173, %p174
      %p176 = scmp.ne.s32.totalorder %s164, %s165
      %p177 = scmp.eq.s32.totalorder %s21, 1
      %p178 = por %p176, %p177
      %p180 = scmp.ne.s32.totalorder %s165, %s179
      %p181 = scmp.eq.s32.totalorder %s21, 0
      %p182 = por %p180, %p181
      %s183 = ssub.s32 %s22, %s34
      %s184 = ssub.s32 %s23, %s30
      %s185 = sor.u32 %s183, %s184
      %p186 = scmp.eq.s32.totalorder %s185, 0
      %s188 = sadd.s32 %s187, 1
      %s189 = scalar_select %p186, %s187, %s188
      %p192 = pneg %p186
      %p193 = scmp.eq.s32.totalorder %s15, 1
      %p194 = por %p192, %p193
      %p195 = scmp.ne.s32.totalorder %s187, %s190
      %p196 = scmp.eq.s32.totalorder %s15, 0
      %p197 = por %p195, %p196
      %p198 = scmp.ne.s32.totalorder %s187, %s190
      %p199 = scmp.eq.s32.totalorder %s20, 1
      %p200 = por %p198, %p199
      %p201 = scmp.ne.s32.totalorder %s190, %s191
      %p202 = scmp.eq.s32.totalorder %s20, 0
      %p203 = por %p201, %p202
      %p204 = scmp.ne.s32.totalorder %s190, %s191
      %p205 = scmp.eq.s32.totalorder %s21, 1
      %p206 = por %p204, %p205
      %p208 = scmp.ne.s32.totalorder %s191, %s207
      %p209 = scmp.eq.s32.totalorder %s21, 0
      %p210 = por %p208, %p209
      %p211 = scmp.le.s32.totalorder 1, %s15
      %p212 = scmp.lt.s32.totalorder %s15, 3
      %p213 = pnand %p211, %p212
      %p214 = pneg %p213
      // Predicated region
      $region9: #{tpu_custom_call.1} parent=5 // pred_check
        _
      $region10: #{tpu_custom_call.1} parent=5 // pred_check_branch
        %216 = sbr.rel (%p213) target = $region12
      $region11: #{tpu_custom_call.1} parent=5 // pred_region
        %s217 = ssub.s32 %s15, 1
        // Predicated region
        $region13: #{tpu_custom_call.1} parent=11 // pred_check
          %p218 = pneg %p154
        $region14: #{tpu_custom_call.1} parent=11 // pred_check_branch
          %220 = sbr.rel (%p218) target = $region16
        $region15: #{tpu_custom_call.1} parent=11 // pred_region
          _
        $region16: #{tpu_custom_call.1} parent=11 // pred_fallthru
          _
        // Predicated region
        $region17: #{tpu_custom_call.1} parent=11 // pred_check
          %p221 = pneg %p175
        $region18: #{tpu_custom_call.1} parent=11 // pred_check_branch
          %223 = sbr.rel (%p221) target = $region20
        $region19: #{tpu_custom_call.1} parent=11 // pred_region
          _
        $region20: #{tpu_custom_call.1} parent=11 // pred_fallthru
          _
      $region12: #{tpu_custom_call.1} parent=5 // pred_fallthru
        _
      %p224 = scmp.lt.s32.totalorder %s15, 2
      // Predicated region
      $region21: #{tpu_custom_call.1} parent=5 // pred_check
        %p225 = pneg %p224
      $region22: #{tpu_custom_call.1} parent=5 // pred_check_branch
        %227 = sbr.rel (%p225) target = $region24
      $region23: #{tpu_custom_call.1} parent=5 // pred_region
        // Predicated region
        $region25: #{tpu_custom_call.1} parent=23 // pred_check
          %p228 = pneg %p49
        $region26: #{tpu_custom_call.1} parent=23 // pred_check_branch
          %230 = sbr.rel (%p228) target = $region28
        $region27: #{tpu_custom_call.1} parent=23 // pred_region
          %p231 = scmp.lt.s32.totalorder %s22, 1
          %s232 = scalar_select %p231, %s22, 1
          %p233 = scmp.lt.s32.totalorder %s23, 0
          %s234 = scalar_select %p233, %s23, 0
          %s235 = sadd.s32 %s234, %s232
          %s236 = smul.addr %s235, 8
          %s237 = scalar_lea.vmem %s0, %s236
        $region28: #{tpu_custom_call.1} parent=23 // pred_fallthru
          _
        // Predicated region
        $region29: #{tpu_custom_call.1} parent=23 // pred_check
          %p238 = pneg %p75
        $region30: #{tpu_custom_call.1} parent=23 // pred_check_branch
          %240 = sbr.rel (%p238) target = $region32
        $region31: #{tpu_custom_call.1} parent=23 // pred_region
          %p241 = scmp.lt.s32.totalorder %s22, 1
          %s242 = scalar_select %p241, %s22, 1
          %s243 = smul.addr %s242, 2
          %s244 = smul.addr %s243, 4
          %s245 = scalar_lea.vmem %s1, %s244
        $region32: #{tpu_custom_call.1} parent=23 // pred_fallthru
          _
        // Predicated region
        $region33: #{tpu_custom_call.1} parent=23 // pred_check
          %p246 = pneg %p101
        $region34: #{tpu_custom_call.1} parent=23 // pred_check_branch
          %248 = sbr.rel (%p246) target = $region36
        $region35: #{tpu_custom_call.1} parent=23 // pred_region
          %p249 = scmp.lt.s32.totalorder %s22, 1
          %s250 = scalar_select %p249, %s22, 1
          %s251 = smul.addr %s250, 8
          %s252 = scalar_lea.vmem %s2, %s251
        $region36: #{tpu_custom_call.1} parent=23 // pred_fallthru
          _
        // Predicated region
        $region37: #{tpu_custom_call.1} parent=23 // pred_check
          %p253 = pneg %p127
        $region38: #{tpu_custom_call.1} parent=23 // pred_check_branch
          %255 = sbr.rel (%p253) target = $region40
        $region39: #{tpu_custom_call.1} parent=23 // pred_region
          %p256 = scmp.lt.s32.totalorder %s22, 1
          %s257 = scalar_select %p256, %s22, 1
          %s258 = smul.addr %s257, 8
          %s259 = scalar_lea.vmem %s3, %s258
        $region40: #{tpu_custom_call.1} parent=23 // pred_fallthru
          _
      $region24: #{tpu_custom_call.1} parent=5 // pred_fallthru
        _
      %p260 = scmp.le.s32.totalorder 1, %s15
      %p261 = scmp.lt.s32.totalorder %s15, 3
      %p262 = pnand %p260, %p261
      %p263 = pneg %p262
      // Predicated region
      $region41: #{tpu_custom_call.1} parent=5 // pred_check
        _
      $region42: #{tpu_custom_call.1} parent=5 // pred_check_branch
        %265 = sbr.rel (%p262) target = $region44
      $region43: #{tpu_custom_call.1} parent=5 // pred_region
        %s266 = ssub.s32 %s15, 1
        %p267 = scmp.lt.s32.totalorder %s24, 1
        %s268 = scalar_select %p267, %s24, 1
        %p269 = scmp.lt.s32.totalorder %s25, 0
        %s270 = scalar_select %p269, %s25, 0
        %s271 = sadd.s32 %s270, %s268
        %s272 = smul.addr %s271, 8
        %s273 = scalar_lea.vmem %s0, %s272
        %p274 = pneg %p55
        %p275 = pneg %p52
        %p276 = scmp.lt.s32.totalorder %s24, 1
        %s277 = scalar_select %p276, %s24, 1
        %s278 = smul.addr %s277, 2
        %s279 = smul.addr %s278, 4
        %s280 = scalar_lea.vmem %s1, %s279
        %p281 = pneg %p81
        %p282 = pneg %p78
        %p283 = scmp.lt.s32.totalorder %s24, 1
        %s284 = scalar_select %p283, %s24, 1
        %s285 = smul.addr %s284, 8
        %s286 = scalar_lea.vmem %s2, %s285
        %p287 = pneg %p107
        %p288 = pneg %p104
        %p289 = scmp.lt.s32.totalorder %s24, 1
        %s290 = scalar_select %p289, %s24, 1
        %s291 = smul.addr %s290, 8
        %s292 = scalar_lea.vmem %s3, %s291
        %p293 = pneg %p133
        %p294 = pneg %p130
        %p295 = pneg %p154
        %p296 = pneg %p151
        %p297 = pneg %p175
        %p298 = pneg %p172
        %p299 = pneg %p203
        %p300 = pneg %p200
        %s301 = sand.u32 %s190, 1
        %s302 = scalar_lea.sflag [#allocation3], %s301
        %s303 = sand.u32 %s190, 1
        %s304 = smul.addr %s303, 16
        %s305 = scalar_lea.vmem [#allocation2], %s304
        %p306 = scmp.lt.s32.totalorder %s24, 1
        %s307 = scalar_select %p306, %s24, 1
        %p308 = scmp.lt.s32.totalorder %s25, 0
        %s309 = scalar_select %p308, %s25, 0
        %s310 = sadd.s32 %s309, %s307
        %s311 = smul.addr %s310, 8
        %s312 = scalar_lea.vmem %s0, %s311
        %p313 = scmp.lt.s32.totalorder %s24, 1
        %s314 = scalar_select %p313, %s24, 1
        %s315 = smul.addr %s314, 2
        %s316 = smul.addr %s315, 4
        %s317 = scalar_lea.vmem %s1, %s316
        %p318 = scmp.lt.s32.totalorder %s24, 1
        %s319 = scalar_select %p318, %s24, 1
        %s320 = smul.addr %s319, 8
        %s321 = scalar_lea.vmem %s2, %s320
        %p322 = scmp.lt.s32.totalorder %s24, 1
        %s323 = scalar_select %p322, %s24, 1
        %s324 = smul.addr %s323, 8
        %s325 = scalar_lea.vmem %s3, %s324
        %v327 = vld [vmem:[%s312] sm:$0xff]
        %v328 = vld [vmem:[%s321] sm:$0xff]
        %330 = vset.pattern.permute.xlu0 0
        %331 = vperm.xlu0 %330, %v328
        %v332 = vpop.permute.xlu0 %331
        %v334 = vmul.f32 %v327, %v332
        %v335 = vld [vmem:[%s325] sm:$0xff]
        %337 = vset.pattern.permute.xlu0 0
        %338 = vperm.xlu0 %337, %v335
        %v339 = vpop.permute.xlu0 %338
        %v341 = vadd.f32 %v334, %v339
        %v342 = vmax.f32 %v341, 0.0
        %v343 = vld [vmem:[%s4] sm:$0xf]
        %v344 = vpack.c.bf16 %v342, %v342
        %v345 = vld [vmem:[%s5] sm:$0xff]
        %347 = vset.pattern.permute.xlu0 0
        %348 = vperm.xlu0 %347, %v345
        %v349 = vpop.permute.xlu0 %348
        %vm351 = vcmask 64512
        %v353 = vsel %vm351, %v343, 0
        %vm355 = vcmask 1043456
        %v357 = vsel %vm355, %v344, 0
        %359 = vmatpush.bf16.msra.mxu0 0
        %360 = vmatpush.bf16.msra.mxu0 0
        %361 = vmatpush.bf16.msra.mxu0 0
        %362 = vmatpush.bf16.msra.mxu0 0
        %363 = vmatpush.bf16.msra.mxu0 0
        %364 = vmatpush.bf16.msra.mxu0 0
        %365 = vmatpush.bf16.msra.mxu0 0
        %366 = vmatpush.bf16.msra.mxu0 %v357
        %367 = vmatmul.bf16.gmra.mxu0 %v353
        %v368 = vpop.f32.mrf.mxu0
        %v369 = vadd.f32 %v349, %v368
        %v370 = vpop.f32.mrf.mxu0
        %371 = vdwg.mxu0
        %vm372 = vcmask 130048
        %v373 = vsel %vm372, %v369, -inf
        %v374 = vrot.slane %v373, 4
        %v375 = vmax.f32 %v373, %v374
        %v376 = vrot.slane %v375, 2
        %v377 = vmax.f32 %v375, %v376
        %v378 = vrot.slane %v377, 1
        %v379 = vmax.f32 %v377, %v378
        %v380 = vsub.f32 %v369, %v379
        %v381 = vmul.f32 %v380, 1.442695
        %v382 = vpow.pop %v381
        %v383 = vsel %vm372, %v382, 0.0
        %v384 = vrot.slane %v383, 4
        %v385 = vadd.f32 %v383, %v384
        %v386 = vrot.slane %v385, 2
        %v387 = vadd.f32 %v385, %v386
        %v388 = vrot.slane %v387, 1
        %v389 = vadd.f32 %v387, %v388
        %v390 = vrcp.pop %v389
        %v391 = vmul.f32 %v382, %v390
        %v392 = vld [vmem:[%s317] sm:$0xf]
        %v393 = vld [vmem:[%s317 + $0x4] sm:$0xf]
        %v394 = vpack.c.bf16 %v391, %v391
        %v397 = vunpack.c.l.b16 %v392
        %v398 = vunpack.c.l.b16 %v393
        %v399 = vpack.c.b16 %v398, %v397
        %v401 = vsel %vm351, %v399, 0
        %v404 = vsel %vm355, %v394, 0
        %406 = vmatpush.bf16.msra.mxu0 0
        %407 = vmatpush.bf16.msra.mxu0 0
        %408 = vmatpush.bf16.msra.mxu0 0
        %409 = vmatpush.bf16.msra.mxu0 0
        %410 = vmatpush.bf16.msra.mxu0 0
        %411 = vmatpush.bf16.msra.mxu0 0
        %412 = vmatpush.bf16.msra.mxu0 0
        %413 = vmatpush.bf16.msra.mxu0 %v404
        %414 = vmatmul.bf16.gmra.mxu0 %v401
        %v415 = vpop.f32.mrf.mxu0
        %v416 = vadd.f32 0.0, %v415
        %v417 = vpop.f32.mrf.mxu0
        %v418 = vadd.f32 0.0, %v417
        %419 = vdwg.mxu0
        %420 = vst.msk [vmem:[%s305] sm:$0xff] %vm372, %v416
        %421 = vst.msk [vmem:[%s305 + $0x8] sm:$0xff] %vm372, %v418
        %s422 = sand.u32 %s190, 1
        %s423 = scalar_lea.sflag [#allocation3], %s422
        %s424 = sand.u32 %s190, 1
        %s425 = smul.addr %s424, 16
        %s426 = scalar_lea.vmem [#allocation2], %s425
        // Predicated region
        $region45: #{tpu_custom_call.1} parent=43 // pred_check
          %p427 = pneg %p200
        $region46: #{tpu_custom_call.1} parent=43 // pred_check_branch
          %429 = sbr.rel (%p427) target = $region48
        $region47: #{tpu_custom_call.1} parent=43 // pred_region
          %431 = vsyncadd %s423, 0
          %s432 = smul.addr %s24, 2
          %s433 = sadd.s32 %s25, %s432
          %s434 = smul.addr %s433, 8
          %s435 = scalar_lea.hbm %s6, %s434
          %s436 = sshll.u32 %s426, 4
          %s437 = int_to_ptr.vmem [resolvable:$true] %s436
          %s438 = sshll.u32 %s435, 4
          %s439 = int_to_ptr.hbm [resolvable:$true] %s438
          %444 = dma.vmem_to_hbm [thread:$0]  %s437, 256, %s439, %s423, 128, 128, 8
        $region48: #{tpu_custom_call.1} parent=43 // pred_fallthru
          _
      $region44: #{tpu_custom_call.1} parent=5 // pred_fallthru
        _
      %p445 = scmp.le.s32.totalorder 2, %s15
      // Predicated region
      $region49: #{tpu_custom_call.1} parent=5 // pred_check
        %p446 = pneg %p445
      $region50: #{tpu_custom_call.1} parent=5 // pred_check_branch
        %448 = sbr.rel (%p446) target = $region52
      $region51: #{tpu_custom_call.1} parent=5 // pred_region
        %s449 = ssub.s32 %s15, 2
        // Predicated region
        $region53: #{tpu_custom_call.1} parent=51 // pred_check
          %p450 = pneg %p206
        $region54: #{tpu_custom_call.1} parent=51 // pred_check_branch
          %452 = sbr.rel (%p450) target = $region56
        $region55: #{tpu_custom_call.1} parent=51 // pred_region
          %s453 = sand.u32 %s191, 1
          %s454 = scalar_lea.sflag [#allocation3], %s453
          %s455 = sand.u32 %s191, 1
          %s456 = smul.addr %s455, 16
          %s457 = scalar_lea.vmem [#allocation2], %s456
          %459 = dma.done %s454, 256
        $region56: #{tpu_custom_call.1} parent=51 // pred_fallthru
          _
      $region52: #{tpu_custom_call.1} parent=5 // pred_fallthru
        _
    $region6: #{tpu_custom_call.1} parent=1 // loop_footer
      %s19 = sadd.s32 1, %s15
    $region7: #{tpu_custom_call.1} parent=1 // loop_footer_branch
      %14 = sbr.rel target = $region3
    $region8: #{tpu_custom_call.1} parent=1 // loop_exit
      _
    %460 = vsyncpa [#allocation3], 1
    %s461 = scalar_lea.sflag [#allocation3], 1
    %462 = vsyncpa %s461, 1

</llo_original>
